<compile_context>
chip_gen: v6e
topology: v6e:2x2x1
jax: 0.10.0
libtpu: 0.0.40
codegen_flags: <defaults>
</compile_context>

<pallas_src>
import jax
import jax.numpy as jnp
from jax.experimental import pallas as pl
from jax.experimental.pallas import tpu as pltpu


def _deriv_quad_relu_kernel(x_ref, o_ref):
    # Transpose first, in the input's native dtype (XLU), then cast+gate (VPU).
    xt = x_ref[...].T                          # (tn, tm), native dtype
    xt = xt.astype(jnp.float32)
    # Multiply form (not jnp.where) to match PyTorch exactly, incl. 0*NaN=NaN.
    o_ref[...] = (xt > 0.0).astype(jnp.float32) * (2.0 * xt)


def _round_up(a, b):
    return (a + b - 1) // b * b


def _padded_choice(dim, max_tile):
    """dim is not 128-divisible: pick the 128-multiple tile (<= max_tile) that
    minimizes the padded size (ties -> larger tile)."""
    cap = max(128, (max_tile // 128) * 128)
    best_t, best_p = 128, _round_up(dim, 128)
    t = 256
    while t <= cap:
        p = _round_up(dim, t)
        if p <= best_p:
            best_t, best_p = t, p
        t += 128
    return best_t, best_p


def _pick_tile(dim, max_tile):
    """Pick (tile, padded_dim) for one axis.  Tiles are always multiples of 128
    (lane-dense stores, fully aligned in-kernel transpose).  Preference:
      1. dim itself when 128-divisible and <= max_tile (single block, no pad),
      2. the largest 128-multiple <= max_tile dividing dim (no pad),
      3. pad this axis only, with the waste-minimizing tile."""
    cap = max(128, (max_tile // 128) * 128)
    if dim % 128 == 0:
        if dim <= cap:
            return dim, dim
        t = cap
        while t >= 128:
            if dim % t == 0:
                return t, dim
            t -= 128
    return _padded_choice(dim, max_tile)


def _sanitize_tile(t, dim):
    """User override: force a legal 128-multiple tile and matching padded dim."""
    t = max(128, _round_up(int(t), 128))
    t = min(t, _round_up(dim, 128))
    return t, _round_up(dim, t)


def deriv_quad_relu(x, *, tm=None, tn=None):
    """out[n, m] = float(x[m, n] > 0) * 2 * x[m, n]; out.shape = (N, M), f32."""
    M, N = x.shape
    in_itemsize = jnp.dtype(x.dtype).itemsize

    # tm is the OUTPUT lane dim: up to 1024 (wide unmasked vst rows, fewer grid
    # steps -- the bigger lever on v7x's 3.2 TB/s HBM, ~1-2% on v6e).
    # tn up to 512 keeps the double-buffered in+out+transpose-temp footprint
    # ~14 MiB for f32 -- comfortable on every generation incl. v7x's 64 MiB.
    max_tm, max_tn = 1024, 512
    tm, Mp = _pick_tile(M, max_tm) if tm is None else _sanitize_tile(tm, M)
    tn, Np = _pick_tile(N, max_tn) if tn is None else _sanitize_tile(tn, N)

    # v7x has 2 TensorCores sharing HBM: avoid a 1x1 grid for non-trivial
    # problems so both cores get work (neutral on 1-TC v5e/v6e).
    if Mp // tm == 1 and Np // tn == 1 and Mp * Np >= (1 << 18):
        if Mp % 256 == 0:
            tm = Mp // 2
        elif Np % 256 == 0:
            tn = Np // 2

    grid = (Mp // tm, Np // tn)

    # Pad only the axes that actually need it (rare after divisor-preferring
    # tile selection); zero padding is semantically inert for this op.
    xp = x if (Mp == M and Np == N) else jnp.pad(x, ((0, Mp - M), (0, Np - N)))

    # VMEM budget: double-buffered input + output tiles, the native-dtype
    # transpose temporary, a possible f32 staging tile, plus headroom.
    vmem_bytes = (
        2 * tm * tn * in_itemsize      # input double buffer
        + 2 * tm * tn * 4              # output double buffer (f32)
        + tm * tn * in_itemsize        # transpose temporary
        + tm * tn * 4                  # gated f32 value before the store
        + (2 << 20)                    # headroom
    )
    # Cap well below v7x's 64 MiB physical VMEM (>=16 MiB left for Mosaic).
    vmem_limit = int(min(max(vmem_bytes, 24 * 1024 * 1024), 40 * 1024 * 1024))

    out = pl.pallas_call(
        _deriv_quad_relu_kernel,
        out_shape=jax.ShapeDtypeStruct((Np, Mp), jnp.float32),
        grid_spec=pltpu.PrefetchScalarGridSpec(
            num_scalar_prefetch=0,
            grid=grid,
            in_specs=[pl.BlockSpec((tm, tn), lambda i, j: (i, j))],
            out_specs=pl.BlockSpec((tn, tm), lambda i, j: (j, i)),
        ),
        compiler_params=pltpu.CompilerParams(
            dimension_semantics=("parallel", "parallel"),
            vmem_limit_bytes=vmem_limit,
        ),
        cost_estimate=pl.CostEstimate(
            flops=3 * M * N,                         # cmp + 2 muls per element
            transcendentals=0,
            bytes_accessed=(in_itemsize + 4) * M * N,
        ),
    )(xp)

    if (Mp, Np) != (M, N):
        out = out[:N, :M]
    return out


def _reference(x):
    xt = x.T
    return (xt > 0.0).astype(jnp.float32) * 2.0 * xt


if __name__ == "__main__":
    key = jax.random.PRNGKey(0)

    # Shape 1: small, exercises the (verified) single-axis-padded path.
    M1, N1 = 16, 256
    x1 = jax.random.normal(key, (M1, N1), dtype=jnp.float32)
    out1 = jax.block_until_ready(deriv_quad_relu(x1))
    ref1 = _reference(x1)
    assert out1.shape == (N1, M1), (out1.shape, (N1, M1))
    assert out1.dtype == jnp.float32, out1.dtype
    assert jnp.allclose(out1, ref1, atol=1e-6, rtol=1e-6), "mismatch (padded path)"

    # Shape 2: 128-divisible, exercises the pad-free divisor-tile fast path.
    M2, N2 = 256, 384
    x2 = jax.random.normal(jax.random.PRNGKey(1), (M2, N2), dtype=jnp.float32)
    out2 = jax.block_until_ready(deriv_quad_relu(x2))
    ref2 = _reference(x2)
    assert out2.shape == (N2, M2), (out2.shape, (N2, M2))
    assert jnp.allclose(out2, ref2, atol=1e-6, rtol=1e-6), "mismatch (no-pad path)"

    print("KERNEL_OK")
</pallas_src>

<mosaic_0001>
module attributes {stable_mosaic.version = 11 : i64} {
  func.func @_deriv_quad_relu_kernel(%arg0: i32, %arg1: i32, %arg2: memref<128x256xf32, #tpu.memory_space<vmem>>, %arg3: memref<256x128xf32, #tpu.memory_space<vmem>>) attributes {dimension_semantics = [#tpu.dimension_semantics<parallel>, #tpu.dimension_semantics<parallel>], iteration_bounds = array<i64: 1, 1>, scalar_prefetch = 0 : i64, scratch_operands = 0 : i64, tpu.core_type = #tpu.core_type<tc>, window_params = [{transform_indices = @transform_0, window_bounds = array<i64: 128, 256>}, {transform_indices = @transform_1, window_bounds = array<i64: 256, 128>}]} {
    %c0 = arith.constant 0 : index
    %c0_0 = arith.constant 0 : index
    %0 = vector.load %arg2[%c0, %c0_0] : memref<128x256xf32, #tpu.memory_space<vmem>>, vector<128x256xf32>
    %1 = tpu.transpose %0, [1, 0] : vector<128x256xf32> -> vector<256x128xf32>
    %cst = arith.constant 0.000000e+00 : f32
    %2 = vector.broadcast %cst : f32 to vector<256x128xf32>
    %3 = arith.cmpf ogt, %1, %2 : vector<256x128xf32>
    %4 = arith.extui %3 : vector<256x128xi1> to vector<256x128xi32>
    %5 = arith.sitofp %4 : vector<256x128xi32> to vector<256x128xf32>
    %cst_1 = arith.constant 2.000000e+00 : f32
    %6 = vector.broadcast %cst_1 : f32 to vector<256x128xf32>
    %7 = arith.mulf %6, %1 : vector<256x128xf32>
    %8 = arith.mulf %5, %7 : vector<256x128xf32>
    %c0_2 = arith.constant 0 : index
    %c0_3 = arith.constant 0 : index
    %9 = vector.load %arg3[%c0_2, %c0_3] : memref<256x128xf32, #tpu.memory_space<vmem>>, vector<256x128xf32>
    tpu.vector_store %arg3[%c0_2, %c0_3], %8 {strides = array<i32>} : memref<256x128xf32, #tpu.memory_space<vmem>>, vector<256x128xf32>,
    return
  }
  func.func @transform_0(%arg0: i32, %arg1: i32) -> (i32, i32) {
    %c0_i32 = arith.constant 0 : i32
    return %arg0, %arg1 : i32, i32
  }
  func.func @transform_1(%arg0: i32, %arg1: i32) -> (i32, i32) {
    %c0_i32 = arith.constant 0 : i32
    return %arg1, %arg0 : i32, i32
  }
}

</mosaic_0001>

<llo_original>
// kernel: tpu_custom_call.1
$region0: #{tpu_custom_call.1}
  #allocation0 [shape = 'u32[]', space=smem, size = 0x4, offset = 0x4, fixed_abs, tag = 'smem constant byte address 0x4 - core index']
  #allocation1 [shape = 'u32[144,128]{1,0:T(1,128)}', space=vmem, size = 0x12000, scoped, tag = 'internal scratch']
  %s0 = inlined_call_operand.hbm [shape: f32[128,256], index: 0, kind: input, shape index: {}]
  %s1 = inlined_call_operand.hbm [shape: f32[256,128], index: 1, kind: output, shape index: {}]
  %s2 = sld [smem:[#allocation0]]
  $region18: #{tpu_custom_call.1} parent=0
    _
  %s4 = ssub.s32 1, %s2
  %s5 = scalar_select 0, %s4, %s2
  $region1: #{tpu_custom_call.1} parent=0
    #allocation2 [shape = 'u8[131072]{0}', space=vmem, size = 0x20000, scoped, tag = 'input window, operand 0, single buffered']
    #allocation3 [shape = 's32[1]{0}', space=sflag, size = 0x4, scoped, tag = 'scoped memory for tpu_custom_call.1']
    #allocation4 [shape = 's32[1]{0}', space=sflag, size = 0x4, scoped, tag = 'scoped memory for tpu_custom_call.1']
    #allocation5 [shape = 'u8[131072]{0}', space=vmem, size = 0x20000, scoped, tag = 'output window, operand 0, single buffered']
    %6 = vsyncpa [#allocation3], 0
    %7 = vsyncpa [#allocation4], 0
    // Predicated region
    $region2: #{tpu_custom_call.1} parent=1 // pred_check
      _
    $region3: #{tpu_custom_call.1} parent=1 // pred_check_branch
      %9 = sbr.rel (0) target = $region5
    $region4: #{tpu_custom_call.1} parent=1 // pred_region
      %s11 = ssub.s32 4096, 4096
      %12 = vsyncadd [#allocation3], %s11
      %s13 = sshll.u32 [#allocation2], 4
      %s14 = int_to_ptr.vmem [resolvable:$true] %s13
      %19 = dma.hbm_to_vmem [thread:$0]  %s0, 4096, %s14, [#allocation3], 256, 256, 16
    $region5: #{tpu_custom_call.1} parent=1 // pred_fallthru
      _
    // Predicated region
    $region6: #{tpu_custom_call.1} parent=1 // pred_check
      _
    $region7: #{tpu_custom_call.1} parent=1 // pred_check_branch
      %21 = sbr.rel (0) target = $region9
    $region8: #{tpu_custom_call.1} parent=1 // pred_region
      %22 = dma.done [#allocation3], 4096
    $region9: #{tpu_custom_call.1} parent=1 // pred_fallthru
      _
    %v23 = vld [vmem:[#allocation2] sm:$0xff]
    %v24 = vld [vmem:[#allocation2 + $0x8] sm:$0xff]
    %v25 = vld [vmem:[#allocation2 + $0x10] sm:$0xff]
    %v26 = vld [vmem:[#allocation2 + $0x18] sm:$0xff]
    %v27 = vld [vmem:[#allocation2 + $0x20] sm:$0xff]
    %v28 = vld [vmem:[#allocation2 + $0x28] sm:$0xff]
    %v29 = vld [vmem:[#allocation2 + $0x30] sm:$0xff]
    %v30 = vld [vmem:[#allocation2 + $0x38] sm:$0xff]
    %v31 = vld [vmem:[#allocation2 + $0x40] sm:$0xff]
    %v32 = vld [vmem:[#allocation2 + $0x48] sm:$0xff]
    %v33 = vld [vmem:[#allocation2 + $0x50] sm:$0xff]
    %v34 = vld [vmem:[#allocation2 + $0x58] sm:$0xff]
    %v35 = vld [vmem:[#allocation2 + $0x60] sm:$0xff]
    %v36 = vld [vmem:[#allocation2 + $0x68] sm:$0xff]
    %v37 = vld [vmem:[#allocation2 + $0x70] sm:$0xff]
    %v38 = vld [vmem:[#allocation2 + $0x78] sm:$0xff]
    %v39 = vld [vmem:[#allocation2 + $0x80] sm:$0xff]
    %v40 = vld [vmem:[#allocation2 + $0x88] sm:$0xff]
    %v41 = vld [vmem:[#allocation2 + $0x90] sm:$0xff]
    %v42 = vld [vmem:[#allocation2 + $0x98] sm:$0xff]
    %v43 = vld [vmem:[#allocation2 + $0xa0] sm:$0xff]
    %v44 = vld [vmem:[#allocation2 + $0xa8] sm:$0xff]
    %v45 = vld [vmem:[#allocation2 + $0xb0] sm:$0xff]
    %v46 = vld [vmem:[#allocation2 + $0xb8] sm:$0xff]
    %v47 = vld [vmem:[#allocation2 + $0xc0] sm:$0xff]
    %v48 = vld [vmem:[#allocation2 + $0xc8] sm:$0xff]
    %v49 = vld [vmem:[#allocation2 + $0xd0] sm:$0xff]
    %v50 = vld [vmem:[#allocation2 + $0xd8] sm:$0xff]
    %v51 = vld [vmem:[#allocation2 + $0xe0] sm:$0xff]
    %v52 = vld [vmem:[#allocation2 + $0xe8] sm:$0xff]
    %v53 = vld [vmem:[#allocation2 + $0xf0] sm:$0xff]
    %v54 = vld [vmem:[#allocation2 + $0xf8] sm:$0xff]
    %55 = vxpose.xlu0.b32.start [1/16] %v23, 128
    %56 = vxpose.xlu0.b32.cont [2/16] %v25, 128
    %57 = vxpose.xlu0.b32.cont [3/16] %v27, 128
    %58 = vxpose.xlu0.b32.cont [4/16] %v29, 128
    %59 = vxpose.xlu0.b32.cont [5/16] %v31, 128
    %60 = vxpose.xlu0.b32.cont [6/16] %v33, 128
    %61 = vxpose.xlu0.b32.cont [7/16] %v35, 128
    %62 = vxpose.xlu0.b32.cont [8/16] %v37, 128
    %63 = vxpose.xlu0.b32.cont [9/16] %v39, 128
    %64 = vxpose.xlu0.b32.cont [10/16] %v41, 128
    %65 = vxpose.xlu0.b32.cont [11/16] %v43, 128
    %66 = vxpose.xlu0.b32.cont [12/16] %v45, 128
    %67 = vxpose.xlu0.b32.cont [13/16] %v47, 128
    %68 = vxpose.xlu0.b32.cont [14/16] %v49, 128
    %69 = vxpose.xlu0.b32.cont [15/16] %v51, 128
    %70 = vxpose.xlu0.b32.end [16/16] %v53, 128
    %v71 = vpop.trf.xlu0
    %v72 = vpop.trf.xlu0
    %v73 = vpop.trf.xlu0
    %v74 = vpop.trf.xlu0
    %v75 = vpop.trf.xlu0
    %v76 = vpop.trf.xlu0
    %v77 = vpop.trf.xlu0
    %v78 = vpop.trf.xlu0
    %v79 = vpop.trf.xlu0
    %v80 = vpop.trf.xlu0
    %v81 = vpop.trf.xlu0
    %v82 = vpop.trf.xlu0
    %v83 = vpop.trf.xlu0
    %v84 = vpop.trf.xlu0
    %v85 = vpop.trf.xlu0
    %v86 = vpop.trf.xlu0
    %87 = vxpose.xlu0.b32.start [1/16] %v24, 128
    %88 = vxpose.xlu0.b32.cont [2/16] %v26, 128
    %89 = vxpose.xlu0.b32.cont [3/16] %v28, 128
    %90 = vxpose.xlu0.b32.cont [4/16] %v30, 128
    %91 = vxpose.xlu0.b32.cont [5/16] %v32, 128
    %92 = vxpose.xlu0.b32.cont [6/16] %v34, 128
    %93 = vxpose.xlu0.b32.cont [7/16] %v36, 128
    %94 = vxpose.xlu0.b32.cont [8/16] %v38, 128
    %95 = vxpose.xlu0.b32.cont [9/16] %v40, 128
    %96 = vxpose.xlu0.b32.cont [10/16] %v42, 128
    %97 = vxpose.xlu0.b32.cont [11/16] %v44, 128
    %98 = vxpose.xlu0.b32.cont [12/16] %v46, 128
    %99 = vxpose.xlu0.b32.cont [13/16] %v48, 128
    %100 = vxpose.xlu0.b32.cont [14/16] %v50, 128
    %101 = vxpose.xlu0.b32.cont [15/16] %v52, 128
    %102 = vxpose.xlu0.b32.end [16/16] %v54, 128
    %v103 = vpop.trf.xlu0
    %v104 = vpop.trf.xlu0
    %v105 = vpop.trf.xlu0
    %v106 = vpop.trf.xlu0
    %v107 = vpop.trf.xlu0
    %v108 = vpop.trf.xlu0
    %v109 = vpop.trf.xlu0
    %v110 = vpop.trf.xlu0
    %v111 = vpop.trf.xlu0
    %v112 = vpop.trf.xlu0
    %v113 = vpop.trf.xlu0
    %v114 = vpop.trf.xlu0
    %v115 = vpop.trf.xlu0
    %v116 = vpop.trf.xlu0
    %v117 = vpop.trf.xlu0
    %v118 = vpop.trf.xlu0
    %vm119 = vcmp.gt.f32.partialorder %v71, 0.0
    %vm120 = vcmp.gt.f32.partialorder %v72, 0.0
    %vm121 = vcmp.gt.f32.partialorder %v73, 0.0
    %vm122 = vcmp.gt.f32.partialorder %v74, 0.0
    %vm123 = vcmp.gt.f32.partialorder %v75, 0.0
    %vm124 = vcmp.gt.f32.partialorder %v76, 0.0
    %vm125 = vcmp.gt.f32.partialorder %v77, 0.0
    %vm126 = vcmp.gt.f32.partialorder %v78, 0.0
    %vm127 = vcmp.gt.f32.partialorder %v79, 0.0
    %vm128 = vcmp.gt.f32.partialorder %v80, 0.0
    %vm129 = vcmp.gt.f32.partialorder %v81, 0.0
    %vm130 = vcmp.gt.f32.partialorder %v82, 0.0
    %vm131 = vcmp.gt.f32.partialorder %v83, 0.0
    %vm132 = vcmp.gt.f32.partialorder %v84, 0.0
    %vm133 = vcmp.gt.f32.partialorder %v85, 0.0
    %vm134 = vcmp.gt.f32.partialorder %v86, 0.0
    %vm135 = vcmp.gt.f32.partialorder %v103, 0.0
    %vm136 = vcmp.gt.f32.partialorder %v104, 0.0
    %vm137 = vcmp.gt.f32.partialorder %v105, 0.0
    %vm138 = vcmp.gt.f32.partialorder %v106, 0.0
    %vm139 = vcmp.gt.f32.partialorder %v107, 0.0
    %vm140 = vcmp.gt.f32.partialorder %v108, 0.0
    %vm141 = vcmp.gt.f32.partialorder %v109, 0.0
    %vm142 = vcmp.gt.f32.partialorder %v110, 0.0
    %vm143 = vcmp.gt.f32.partialorder %v111, 0.0
    %vm144 = vcmp.gt.f32.partialorder %v112, 0.0
    %vm145 = vcmp.gt.f32.partialorder %v113, 0.0
    %vm146 = vcmp.gt.f32.partialorder %v114, 0.0
    %vm147 = vcmp.gt.f32.partialorder %v115, 0.0
    %vm148 = vcmp.gt.f32.partialorder %v116, 0.0
    %vm149 = vcmp.gt.f32.partialorder %v117, 0.0
    %vm150 = vcmp.gt.f32.partialorder %v118, 0.0
    %v151 = vsel %vm119, 1, 0
    %v152 = vsel %vm120, 1, 0
    %v153 = vsel %vm121, 1, 0
    %v154 = vsel %vm122, 1, 0
    %v155 = vsel %vm123, 1, 0
    %v156 = vsel %vm124, 1, 0
    %v157 = vsel %vm125, 1, 0
    %v158 = vsel %vm126, 1, 0
    %v159 = vsel %vm127, 1, 0
    %v160 = vsel %vm128, 1, 0
    %v161 = vsel %vm129, 1, 0
    %v162 = vsel %vm130, 1, 0
    %v163 = vsel %vm131, 1, 0
    %v164 = vsel %vm132, 1, 0
    %v165 = vsel %vm133, 1, 0
    %v166 = vsel %vm134, 1, 0
    %v167 = vsel %vm135, 1, 0
    %v168 = vsel %vm136, 1, 0
    %v169 = vsel %vm137, 1, 0
    %v170 = vsel %vm138, 1, 0
    %v171 = vsel %vm139, 1, 0
    %v172 = vsel %vm140, 1, 0
    %v173 = vsel %vm141, 1, 0
    %v174 = vsel %vm142, 1, 0
    %v175 = vsel %vm143, 1, 0
    %v176 = vsel %vm144, 1, 0
    %v177 = vsel %vm145, 1, 0
    %v178 = vsel %vm146, 1, 0
    %v179 = vsel %vm147, 1, 0
    %v180 = vsel %vm148, 1, 0
    %v181 = vsel %vm149, 1, 0
    %v182 = vsel %vm150, 1, 0
    %v183 = vcvt.s32.f32 %v151
    %v184 = vcvt.s32.f32 %v152
    %v185 = vcvt.s32.f32 %v153
    %v186 = vcvt.s32.f32 %v154
    %v187 = vcvt.s32.f32 %v155
    %v188 = vcvt.s32.f32 %v156
    %v189 = vcvt.s32.f32 %v157
    %v190 = vcvt.s32.f32 %v158
    %v191 = vcvt.s32.f32 %v159
    %v192 = vcvt.s32.f32 %v160
    %v193 = vcvt.s32.f32 %v161
    %v194 = vcvt.s32.f32 %v162
    %v195 = vcvt.s32.f32 %v163
    %v196 = vcvt.s32.f32 %v164
    %v197 = vcvt.s32.f32 %v165
    %v198 = vcvt.s32.f32 %v166
    %v199 = vcvt.s32.f32 %v167
    %v200 = vcvt.s32.f32 %v168
    %v201 = vcvt.s32.f32 %v169
    %v202 = vcvt.s32.f32 %v170
    %v203 = vcvt.s32.f32 %v171
    %v204 = vcvt.s32.f32 %v172
    %v205 = vcvt.s32.f32 %v173
    %v206 = vcvt.s32.f32 %v174
    %v207 = vcvt.s32.f32 %v175
    %v208 = vcvt.s32.f32 %v176
    %v209 = vcvt.s32.f32 %v177
    %v210 = vcvt.s32.f32 %v178
    %v211 = vcvt.s32.f32 %v179
    %v212 = vcvt.s32.f32 %v180
    %v213 = vcvt.s32.f32 %v181
    %v214 = vcvt.s32.f32 %v182
    %v215 = vmul.f32 %v71, 2.0
    %v216 = vmul.f32 %v72, 2.0
    %v217 = vmul.f32 %v73, 2.0
    %v218 = vmul.f32 %v74, 2.0
    %v219 = vmul.f32 %v75, 2.0
    %v220 = vmul.f32 %v76, 2.0
    %v221 = vmul.f32 %v77, 2.0
    %v222 = vmul.f32 %v78, 2.0
    %v223 = vmul.f32 %v79, 2.0
    %v224 = vmul.f32 %v80, 2.0
    %v225 = vmul.f32 %v81, 2.0
    %v226 = vmul.f32 %v82, 2.0
    %v227 = vmul.f32 %v83, 2.0
    %v228 = vmul.f32 %v84, 2.0
    %v229 = vmul.f32 %v85, 2.0
    %v230 = vmul.f32 %v86, 2.0
    %v231 = vmul.f32 %v103, 2.0
    %v232 = vmul.f32 %v104, 2.0
    %v233 = vmul.f32 %v105, 2.0
    %v234 = vmul.f32 %v106, 2.0
    %v235 = vmul.f32 %v107, 2.0
    %v236 = vmul.f32 %v108, 2.0
    %v237 = vmul.f32 %v109, 2.0
    %v238 = vmul.f32 %v110, 2.0
    %v239 = vmul.f32 %v111, 2.0
    %v240 = vmul.f32 %v112, 2.0
    %v241 = vmul.f32 %v113, 2.0
    %v242 = vmul.f32 %v114, 2.0
    %v243 = vmul.f32 %v115, 2.0
    %v244 = vmul.f32 %v116, 2.0
    %v245 = vmul.f32 %v117, 2.0
    %v246 = vmul.f32 %v118, 2.0
    %v247 = vmul.f32 %v183, %v215
    %v248 = vmul.f32 %v184, %v216
    %v249 = vmul.f32 %v185, %v217
    %v250 = vmul.f32 %v186, %v218
    %v251 = vmul.f32 %v187, %v219
    %v252 = vmul.f32 %v188, %v220
    %v253 = vmul.f32 %v189, %v221
    %v254 = vmul.f32 %v190, %v222
    %v255 = vmul.f32 %v191, %v223
    %v256 = vmul.f32 %v192, %v224
    %v257 = vmul.f32 %v193, %v225
    %v258 = vmul.f32 %v194, %v226
    %v259 = vmul.f32 %v195, %v227
    %v260 = vmul.f32 %v196, %v228
    %v261 = vmul.f32 %v197, %v229
    %v262 = vmul.f32 %v198, %v230
    %v263 = vmul.f32 %v199, %v231
    %v264 = vmul.f32 %v200, %v232
    %v265 = vmul.f32 %v201, %v233
    %v266 = vmul.f32 %v202, %v234
    %v267 = vmul.f32 %v203, %v235
    %v268 = vmul.f32 %v204, %v236
    %v269 = vmul.f32 %v205, %v237
    %v270 = vmul.f32 %v206, %v238
    %v271 = vmul.f32 %v207, %v239
    %v272 = vmul.f32 %v208, %v240
    %v273 = vmul.f32 %v209, %v241
    %v274 = vmul.f32 %v210, %v242
    %v275 = vmul.f32 %v211, %v243
    %v276 = vmul.f32 %v212, %v244
    %v277 = vmul.f32 %v213, %v245
    %v278 = vmul.f32 %v214, %v246
    %279 = vst [vmem:[#allocation5] sm:$0xff] %v247
    %280 = vst [vmem:[#allocation5 + $0x8] sm:$0xff] %v248
    %281 = vst [vmem:[#allocation5 + $0x10] sm:$0xff] %v249
    %282 = vst [vmem:[#allocation5 + $0x18] sm:$0xff] %v250
    %283 = vst [vmem:[#allocation5 + $0x20] sm:$0xff] %v251
    %284 = vst [vmem:[#allocation5 + $0x28] sm:$0xff] %v252
    %285 = vst [vmem:[#allocation5 + $0x30] sm:$0xff] %v253
    %286 = vst [vmem:[#allocation5 + $0x38] sm:$0xff] %v254
    %287 = vst [vmem:[#allocation5 + $0x40] sm:$0xff] %v255
    %288 = vst [vmem:[#allocation5 + $0x48] sm:$0xff] %v256
    %289 = vst [vmem:[#allocation5 + $0x50] sm:$0xff] %v257
    %290 = vst [vmem:[#allocation5 + $0x58] sm:$0xff] %v258
    %291 = vst [vmem:[#allocation5 + $0x60] sm:$0xff] %v259
    %292 = vst [vmem:[#allocation5 + $0x68] sm:$0xff] %v260
    %293 = vst [vmem:[#allocation5 + $0x70] sm:$0xff] %v261
    %294 = vst [vmem:[#allocation5 + $0x78] sm:$0xff] %v262
    %295 = vst [vmem:[#allocation5 + $0x80] sm:$0xff] %v263
    %296 = vst [vmem:[#allocation5 + $0x88] sm:$0xff] %v264
    %297 = vst [vmem:[#allocation5 + $0x90] sm:$0xff] %v265
    %298 = vst [vmem:[#allocation5 + $0x98] sm:$0xff] %v266
    %299 = vst [vmem:[#allocation5 + $0xa0] sm:$0xff] %v267
    %300 = vst [vmem:[#allocation5 + $0xa8] sm:$0xff] %v268
    %301 = vst [vmem:[#allocation5 + $0xb0] sm:$0xff] %v269
    %302 = vst [vmem:[#allocation5 + $0xb8] sm:$0xff] %v270
    %303 = vst [vmem:[#allocation5 + $0xc0] sm:$0xff] %v271
    %304 = vst [vmem:[#allocation5 + $0xc8] sm:$0xff] %v272
    %305 = vst [vmem:[#allocation5 + $0xd0] sm:$0xff] %v273
    %306 = vst [vmem:[#allocation5 + $0xd8] sm:$0xff] %v274
    %307 = vst [vmem:[#allocation5 + $0xe0] sm:$0xff] %v275
    %308 = vst [vmem:[#allocation5 + $0xe8] sm:$0xff] %v276
    %309 = vst [vmem:[#allocation5 + $0xf0] sm:$0xff] %v277
    %310 = vst [vmem:[#allocation5 + $0xf8] sm:$0xff] %v278
    // Predicated region
    $region10: #{tpu_custom_call.1} parent=1 // pred_check
      _
    $region11: #{tpu_custom_call.1} parent=1 // pred_check_branch
      %312 = sbr.rel (0) target = $region13
    $region12: #{tpu_custom_call.1} parent=1 // pred_region
      %s314 = ssub.s32 4096, 4096
      %315 = vsyncadd [#allocation4], %s314
      %s316 = sshll.u32 [#allocation5], 4
      %s317 = int_to_ptr.vmem [resolvable:$true] %s316
      %322 = dma.vmem_to_hbm [thread:$0]  %s317, 4096, %s1, [#allocation4], 128, 128, 8
    $region13: #{tpu_custom_call.1} parent=1 // pred_fallthru
      _
    // Predicated region
    $region14: #{tpu_custom_call.1} parent=1 // pred_check
      _
    $region15: #{tpu_custom_call.1} parent=1 // pred_check_branch
      %324 = sbr.rel (0) target = $region17
    $region16: #{tpu_custom_call.1} parent=1 // pred_region
      %325 = dma.done [#allocation4], 4096
    $region17: #{tpu_custom_call.1} parent=1 // pred_fallthru
      _
    %326 = vsyncpa [#allocation3], 1
    %327 = vsyncpa [#allocation4], 1

</llo_original>
